<compile_context>
chip_gen: v5e
topology: v5e:2x2
jax: 0.10.0
libtpu: 0.0.40
codegen_flags: <defaults>
</compile_context>

<pallas_src>
import functools

import jax
import jax.numpy as jnp
from jax import lax
from jax.experimental import pallas as pl
from jax.experimental.pallas import tpu as pltpu


# ----------------------------- tiling helper -------------------------------

def _pick_tile(dim, cap, align):
    """Largest `align`-multiple tile <= cap that evenly divides `dim`.

    Falls back to the full dimension (block == array dim is always legal)."""
    if dim <= cap:
        return dim
    t = (cap // align) * align
    while t >= align:
        if dim % t == 0:
            return t
        t -= align
    return dim


# ----------------------------- Pallas kernels ------------------------------

def _matmul_kernel(x_ref, w_ref, o_ref, acc_ref):
    @pl.when(pl.program_id(2) == 0)
    def _init():
        acc_ref[...] = jnp.zeros_like(acc_ref)

    acc_ref[...] += jnp.dot(x_ref[...], w_ref[...],
                            preferred_element_type=jnp.float32)

    @pl.when(pl.program_id(2) == pl.num_programs(2) - 1)
    def _store():
        o_ref[...] = acc_ref[...].astype(o_ref.dtype)


def _matmul_bias_kernel(x_ref, w_ref, b_ref, o_ref, acc_ref):
    @pl.when(pl.program_id(2) == 0)
    def _init():
        acc_ref[...] = jnp.zeros_like(acc_ref)

    acc_ref[...] += jnp.dot(x_ref[...], w_ref[...],
                            preferred_element_type=jnp.float32)

    @pl.when(pl.program_id(2) == pl.num_programs(2) - 1)
    def _store():
        # Bias added exactly once, in the final K step only.
        o_ref[...] = (acc_ref[...] + b_ref[...]).astype(o_ref.dtype)


def _attention_kernel(qkv_q_ref, qkv_kv_ref, o_ref, *, num_heads, head_dim,
                      dim, scale):
    # qkv_q_ref : (1, tq, 3C) query-row tile of the fused QKV activation
    # qkv_kv_ref: (1, N , 3C) full-length tile (keys/values sliced from it)
    outs = []
    for h in range(num_heads):
        q0 = h * head_dim
        k0 = dim + h * head_dim
        v0 = 2 * dim + h * head_dim
        # Fold softmax scale into q: tq*hd VALU ops instead of tq*N.
        q = qkv_q_ref[0, :, q0:q0 + head_dim] * scale            # (tq, hd)
        k = qkv_kv_ref[0, :, k0:k0 + head_dim]                   # (N , hd)
        v = qkv_kv_ref[0, :, v0:v0 + head_dim]                   # (N , hd)

        # q @ k^T with no explicit transpose: contract the last dims.
        s = lax.dot_general(q, k, (((1,), (1,)), ((), ())),
                            preferred_element_type=jnp.float32)  # (tq, N)
        s = s - jnp.max(s, axis=-1, keepdims=True)               # stable softmax
        p = jnp.exp(s)
        p = p * pl.reciprocal(jnp.sum(p, axis=-1, keepdims=True), approx=True)
        o = jnp.dot(p.astype(v.dtype), v,
                    preferred_element_type=jnp.float32)          # (tq, hd)
        outs.append(o.astype(o_ref.dtype))
    # One lane-dense store of all heads, already in merged (tq, C) layout.
    o_ref[0] = jnp.concatenate(outs, axis=-1)


# ----------------------------- tiled matmul --------------------------------

def _tiled_matmul(x, w, bias=None, *, tm_cap=256, tn_cap=256, tk_cap=512):
    """(M, K) @ (K, Nc) [+ bias] with a K-accumulating tiled grid."""
    M, K = x.shape
    _, Nc = w.shape
    tm = _pick_tile(M, tm_cap, 8)
    tn = _pick_tile(Nc, tn_cap, 128)
    tk = _pick_tile(K, tk_cap, 128)
    grid = (M // tm, Nc // tn, K // tk)

    in_specs = [pl.BlockSpec((tm, tk), lambda i, j, k: (i, k)),
                pl.BlockSpec((tk, tn), lambda i, j, k: (k, j))]
    operands = (x, w)
    kernel = _matmul_kernel
    if bias is not None:
        in_specs.append(pl.BlockSpec((1, tn), lambda i, j, k: (0, j)))
        operands = (x, w, bias)
        kernel = _matmul_bias_kernel

    cost = pl.CostEstimate(
        flops=2 * M * Nc * K,
        transcendentals=0,
        bytes_accessed=(M * K + K * Nc + M * Nc) * x.dtype.itemsize)

    return pl.pallas_call(
        kernel,
        out_shape=jax.ShapeDtypeStruct((M, Nc), x.dtype),
        grid_spec=pltpu.PrefetchScalarGridSpec(
            num_scalar_prefetch=0,
            grid=grid,
            in_specs=in_specs,
            out_specs=pl.BlockSpec((tm, tn), lambda i, j, k: (i, j)),
            scratch_shapes=[pltpu.VMEM((tm, tn), jnp.float32)]),
        compiler_params=pltpu.CompilerParams(
            dimension_semantics=("parallel", "parallel", "arbitrary"),
            vmem_limit_bytes=32 * 1024 * 1024),
        cost_estimate=cost,
    )(*operands)


# ------------------------------ Wrapper -------------------------------------

def attention_forward(x, w_qkv, w_proj, b_proj, num_heads):
    """x: (B, N, C); w_qkv: (C, 3C); w_proj: (C, C); b_proj: (1, C)."""
    B, N, C = x.shape
    hd = C // num_heads
    scale = float(hd) ** -0.5
    dtype = x.dtype

    # --- Fused QKV projection (tiled, K-accumulated) ---
    qkv = _tiled_matmul(x.reshape(B * N, C), w_qkv)          # (B*N, 3C)
    qkv = qkv.reshape(B, N, 3 * C)                           # metadata-only reshape

    # --- Multi-head attention. Heads are sliced in-kernel out of the fused
    #     (.., 3C) layout and the output is written directly in merged
    #     (B, N, C) layout, so no XLA relayouts occur between kernels. ---
    tq = _pick_tile(N, 256, 8)
    grid = (B, N // tq)
    cost = pl.CostEstimate(
        flops=4 * B * num_heads * N * N * hd,
        transcendentals=B * num_heads * N * N,
        bytes_accessed=(2 * B * N * 3 * C + B * N * C) * x.dtype.itemsize)

    attn_out = pl.pallas_call(
        functools.partial(_attention_kernel, num_heads=num_heads,
                          head_dim=hd, dim=C, scale=scale),
        out_shape=jax.ShapeDtypeStruct((B, N, C), dtype),
        grid=grid,
        in_specs=[pl.BlockSpec((1, tq, 3 * C), lambda b, i: (b, i, 0)),
                  pl.BlockSpec((1, N, 3 * C), lambda b, i: (b, 0, 0))],
        out_specs=pl.BlockSpec((1, tq, C), lambda b, i: (b, i, 0)),
        compiler_params=pltpu.CompilerParams(
            dimension_semantics=("parallel", "parallel"),
            vmem_limit_bytes=32 * 1024 * 1024),
        cost_estimate=cost,
    )(qkv, qkv)

    # --- Output projection with bias (tiled, bias only in final K step) ---
    out = _tiled_matmul(attn_out.reshape(B * N, C), w_proj, b_proj)
    return out.reshape(B, N, C)


# ------------------------------ Reference ------------------------------------

def attention_reference(x, w_qkv, w_proj, b_proj, num_heads):
    B, N, C = x.shape
    hd = C // num_heads
    scale = float(hd) ** -0.5
    qkv = (x.reshape(B * N, C) @ w_qkv).reshape(B, N, 3, num_heads, hd)
    qkv = qkv.transpose(2, 0, 3, 1, 4)
    q, k, v = qkv[0], qkv[1], qkv[2]
    attn = jnp.einsum("bhqd,bhkd->bhqk", q, k) * scale
    attn = jax.nn.softmax(attn, axis=-1)
    o = jnp.einsum("bhqk,bhkd->bhqd", attn, v)
    o = o.transpose(0, 2, 1, 3).reshape(B * N, C)
    return (o @ w_proj + b_proj).reshape(B, N, C)


# ------------------------------- Main ----------------------------------------

if __name__ == "__main__":
    B, N, C = 2, 8, 32
    num_heads = 8  # head_dim = 4

    key = jax.random.PRNGKey(0)
    kx, kq, kp, kb = jax.random.split(key, 4)

    x = jax.random.normal(kx, (B, N, C), dtype=jnp.float32)
    # Deterministic synthetic parameters (nn.Linear shapes, stored pre-transposed).
    w_qkv = 0.05 * jax.random.normal(kq, (C, 3 * C), dtype=jnp.float32)   # qkv_bias=False
    w_proj = 0.05 * jax.random.normal(kp, (C, C), dtype=jnp.float32)
    b_proj = 0.05 * jax.random.normal(kb, (1, C), dtype=jnp.float32)

    out = attention_forward(x, w_qkv, w_proj, b_proj, num_heads)
    out = jax.block_until_ready(out)

    ref = attention_reference(x, w_qkv, w_proj, b_proj, num_heads)
    assert out.shape == (B, N, C)
    # Tolerance accounts for the EUP approximate reciprocal in the softmax.
    assert jnp.allclose(out, ref, atol=2e-3, rtol=2e-3), "mismatch vs reference"

    print("KERNEL_OK")
</pallas_src>

<mosaic_0001>
module attributes {stable_mosaic.version = 11 : i64} {
  func.func @_matmul_kernel(%arg0: i32, %arg1: i32, %arg2: i32, %arg3: memref<16x32xf32, #tpu.memory_space<vmem>>, %arg4: memref<32x96xf32, #tpu.memory_space<vmem>>, %arg5: memref<16x96xf32, #tpu.memory_space<vmem>>, %arg6: memref<16x96xf32, #tpu.memory_space<vmem>>) attributes {dimension_semantics = [#tpu.dimension_semantics<parallel>, #tpu.dimension_semantics<parallel>, #tpu.dimension_semantics<arbitrary>], iteration_bounds = array<i64: 1, 1, 1>, scalar_prefetch = 0 : i64, scratch_operands = 1 : i64, tpu.core_type = #tpu.core_type<tc>, window_params = [{transform_indices = @transform_0, window_bounds = array<i64: 16, 32>}, {transform_indices = @transform_1, window_bounds = array<i64: 32, 96>}, {transform_indices = @transform_2, window_bounds = array<i64: 16, 96>}]} {
    %c0_i32 = arith.constant 0 : i32
    %0 = arith.cmpi eq, %arg2, %c0_i32 : i32
    %1 = arith.extui %0 : i1 to i32
    %c0_i32_0 = arith.constant 0 : i32
    %2 = arith.cmpi ne, %1, %c0_i32_0 : i32
    scf.if %2 {
      %cst_10 = arith.constant 0.000000e+00 : f32
      %12 = vector.broadcast %cst_10 : f32 to vector<16x96xf32>
      %c0_11 = arith.constant 0 : index
      %c0_12 = arith.constant 0 : index
      %13 = vector.load %arg6[%c0_11, %c0_12] : memref<16x96xf32, #tpu.memory_space<vmem>>, vector<16x96xf32>
      tpu.vector_store %arg6[%c0_11, %c0_12], %12 {strides = array<i32>} : memref<16x96xf32, #tpu.memory_space<vmem>>, vector<16x96xf32>,
    } else {
    }
    %c0 = arith.constant 0 : index
    %c0_1 = arith.constant 0 : index
    %3 = vector.load %arg6[%c0, %c0_1] : memref<16x96xf32, #tpu.memory_space<vmem>>, vector<16x96xf32>
    %c0_2 = arith.constant 0 : index
    %c0_3 = arith.constant 0 : index
    %4 = vector.load %arg3[%c0_2, %c0_3] : memref<16x32xf32, #tpu.memory_space<vmem>>, vector<16x32xf32>
    %c0_4 = arith.constant 0 : index
    %c0_5 = arith.constant 0 : index
    %5 = vector.load %arg4[%c0_4, %c0_5] : memref<32x96xf32, #tpu.memory_space<vmem>>, vector<32x96xf32>
    %cst = arith.constant dense<0.000000e+00> : vector<16x96xf32>
    %6 = tpu.matmul %4, %5, %cst {dimension_numbers = #tpu.dot_dimension_numbers<[1], [0], [0], [1], [0, 0, 1, 1], [], []>} : vector<16x32xf32>, vector<32x96xf32>, vector<16x96xf32> -> vector<16x96xf32>
    %7 = arith.addf %3, %6 : vector<16x96xf32>
    %c0_6 = arith.constant 0 : index
    %c0_7 = arith.constant 0 : index
    %8 = vector.load %arg6[%c0_6, %c0_7] : memref<16x96xf32, #tpu.memory_space<vmem>>, vector<16x96xf32>
    tpu.vector_store %arg6[%c0_6, %c0_7], %7 {strides = array<i32>} : memref<16x96xf32, #tpu.memory_space<vmem>>, vector<16x96xf32>,
    %c0_i32_8 = arith.constant 0 : i32
    %9 = arith.cmpi eq, %arg2, %c0_i32_8 : i32
    %10 = arith.extui %9 : i1 to i32
    %c0_i32_9 = arith.constant 0 : i32
    %11 = arith.cmpi ne, %10, %c0_i32_9 : i32
    scf.if %11 {
      %c0_10 = arith.constant 0 : index
      %c0_11 = arith.constant 0 : index
      %12 = vector.load %arg6[%c0_10, %c0_11] : memref<16x96xf32, #tpu.memory_space<vmem>>, vector<16x96xf32>
      %c0_12 = arith.constant 0 : index
      %c0_13 = arith.constant 0 : index
      %13 = vector.load %arg5[%c0_12, %c0_13] : memref<16x96xf32, #tpu.memory_space<vmem>>, vector<16x96xf32>
      tpu.vector_store %arg5[%c0_12, %c0_13], %12 {strides = array<i32>} : memref<16x96xf32, #tpu.memory_space<vmem>>, vector<16x96xf32>,
    } else {
    }
    return
  }
  func.func @transform_0(%arg0: i32, %arg1: i32, %arg2: i32) -> (i32, i32) {
    %c0_i32 = arith.constant 0 : i32
    return %arg0, %arg2 : i32, i32
  }
  func.func @transform_1(%arg0: i32, %arg1: i32, %arg2: i32) -> (i32, i32) {
    %c0_i32 = arith.constant 0 : i32
    return %arg2, %arg1 : i32, i32
  }
  func.func @transform_2(%arg0: i32, %arg1: i32, %arg2: i32) -> (i32, i32) {
    %c0_i32 = arith.constant 0 : i32
    return %arg0, %arg1 : i32, i32
  }
}

</mosaic_0001>

<llo_original>
// kernel: tpu_custom_call.1
$region0: #{tpu_custom_call.1}
  #allocation0 [shape = 'u32[]', space=smem, size = 0x4, offset = 0x4, fixed_abs, tag = 'smem constant byte address 0x4 - core index']
  #allocation1 [shape = 'u32[72,128]{1,0:T(1,128)}', space=vmem, size = 0x9000, scoped, tag = 'internal scratch']
  #allocation2 [shape = 'f32[16,96]{1,0:T(8,128)}', space=vmem, size = 0x2000, scoped, tag = 'scratch operand']
  %s0 = inlined_call_operand.hbm [shape: f32[16,32], index: 0, kind: input, shape index: {}]
  %s1 = inlined_call_operand.hbm [shape: f32[32,96], index: 1, kind: input, shape index: {}]
  %s2 = inlined_call_operand.hbm [shape: f32[16,96], index: 2, kind: output, shape index: {}]
  %s3 = sld [smem:[#allocation0]]
  $region34: #{tpu_custom_call.1} parent=0
    _
  %s5 = ssub.s32 1, %s3
  %s6 = scalar_select 0, %s5, %s3
  $region1: #{tpu_custom_call.1} parent=0
    #allocation3 [shape = 'u8[8192]{0}', space=vmem, size = 0x2000, scoped, tag = 'input window, operand 0, single buffered']
    #allocation4 [shape = 's32[1]{0}', space=sflag, size = 0x4, scoped, tag = 'scoped memory for tpu_custom_call.1']
    #allocation5 [shape = 's32[1]{0}', space=sflag, size = 0x4, scoped, tag = 'scoped memory for tpu_custom_call.1']
    #allocation6 [shape = 'u8[16384]{0}', space=vmem, size = 0x4000, scoped, tag = 'input window, operand 1, single buffered']
    #allocation7 [shape = 's32[1]{0}', space=sflag, size = 0x4, scoped, tag = 'scoped memory for tpu_custom_call.1']
    #allocation8 [shape = 'u8[8192]{0}', space=vmem, size = 0x2000, scoped, tag = 'output window, operand 0, single buffered']
    %7 = vsyncpa [#allocation4], 0
    %8 = vsyncpa [#allocation7], 0
    %9 = vsyncpa [#allocation5], 0
    // Predicated region
    $region2: #{tpu_custom_call.1} parent=1 // pred_check
      _
    $region3: #{tpu_custom_call.1} parent=1 // pred_check_branch
      %11 = sbr.rel (0) target = $region5
    $region4: #{tpu_custom_call.1} parent=1 // pred_region
      %13 = vsyncadd [#allocation4], 0
      %s14 = sshll.u32 %s0, 4
      %s15 = int_to_ptr.hbm [resolvable:$true] %s14
      %s16 = sshll.u32 [#allocation3], 4
      %s17 = int_to_ptr.vmem [resolvable:$true] %s16
      %22 = dma.hbm_to_vmem [thread:$0]  %s15, 256, %s17, [#allocation4], 128, 128, 8
    $region5: #{tpu_custom_call.1} parent=1 // pred_fallthru
      _
    // Predicated region
    $region6: #{tpu_custom_call.1} parent=1 // pred_check
      _
    $region7: #{tpu_custom_call.1} parent=1 // pred_check_branch
      %24 = sbr.rel (0) target = $region9
    $region8: #{tpu_custom_call.1} parent=1 // pred_region
      %26 = vsyncadd [#allocation7], 0
      %s27 = sshll.u32 %s1, 4
      %s28 = int_to_ptr.hbm [resolvable:$true] %s27
      %s29 = sshll.u32 [#allocation6], 4
      %s30 = int_to_ptr.vmem [resolvable:$true] %s29
      %35 = dma.hbm_to_vmem [thread:$0]  %s28, 512, %s30, [#allocation7], 128, 128, 8
    $region9: #{tpu_custom_call.1} parent=1 // pred_fallthru
      _
    // Predicated region
    $region10: #{tpu_custom_call.1} parent=1 // pred_check
      _
    $region11: #{tpu_custom_call.1} parent=1 // pred_check_branch
      %37 = sbr.rel (0) target = $region13
    $region12: #{tpu_custom_call.1} parent=1 // pred_region
      %39 = dma.done [#allocation4], 256
    $region13: #{tpu_custom_call.1} parent=1 // pred_fallthru
      _
    // Predicated region
    $region14: #{tpu_custom_call.1} parent=1 // pred_check
      _
    $region15: #{tpu_custom_call.1} parent=1 // pred_check_branch
      %41 = sbr.rel (0) target = $region17
    $region16: #{tpu_custom_call.1} parent=1 // pred_region
      %43 = dma.done [#allocation7], 512
    $region17: #{tpu_custom_call.1} parent=1 // pred_fallthru
      _
    %p44 = scmp.eq.s32.totalorder 0, 0
    // Predicated region
    $region18: #{tpu_custom_call.1} parent=1 // pred_check
      %p45 = pneg %p44
    $region19: #{tpu_custom_call.1} parent=1 // pred_check_branch
      %47 = sbr.rel (%p45) target = $region21
    $region20: #{tpu_custom_call.1} parent=1 // pred_region
      %vm48 = vcmask 785408
      %49 = vst.msk [vmem:[#allocation2] sm:$0xff] %vm48, 0.0
      %50 = vst.msk [vmem:[#allocation2 + $0x8] sm:$0xff] %vm48, 0.0
    $region21: #{tpu_custom_call.1} parent=1 // pred_fallthru
      _
    %v51 = vld [vmem:[#allocation2] sm:$0xff]
    %v52 = vld [vmem:[#allocation2 + $0x8] sm:$0xff]
    %v53 = vld [vmem:[#allocation3] sm:$0xff]
    %v54 = vld [vmem:[#allocation3 + $0x8] sm:$0xff]
    %v55 = vld [vmem:[#allocation6] sm:$0xff]
    %v56 = vld [vmem:[#allocation6 + $0x8] sm:$0xff]
    %v57 = vld [vmem:[#allocation6 + $0x10] sm:$0xff]
    %v58 = vld [vmem:[#allocation6 + $0x18] sm:$0xff]
    %vm59 = vcmask 261120
    %v61 = vsel %vm59, %v53, 0
    %v64 = vsel %vm59, %v54, 0
    %66 = vmatpush.msra.mxu0 0.0
    %67 = vmatpush.msra.mxu0 0.0
    %68 = vmatpush.msra.mxu0 0.0
    %69 = vmatpush.msra.mxu0 0.0
    %70 = vmatpush.msra.mxu0 0.0
    %71 = vmatpush.msra.mxu0 0.0
    %72 = vmatpush.msra.mxu0 0.0
    %73 = vmatpush.msra.mxu0 0.0
    %74 = vmatpush.msra.mxu0 0.0
    %75 = vmatpush.msra.mxu0 0.0
    %76 = vmatpush.msra.mxu0 0.0
    %77 = vmatpush.msra.mxu0 0.0
    %78 = vmatpush.msra.mxu0 %v58
    %79 = vmatpush.msra.mxu0 %v57
    %80 = vmatpush.msra.mxu0 %v56
    %81 = vmatpush.msra.mxu0 %v55
    %82 = vmatmul.f32.gmra.mxu0 %v61
    %v83 = vpop.f32.mrf.mxu0
    %v84 = vadd.f32 0.0, %v83
    %85 = vmatmul.f32.gmra.mxu0 %v64
    %v86 = vpop.f32.mrf.mxu0
    %v87 = vadd.f32 0.0, %v86
    %88 = vdwg.mxu0
    %v89 = vadd.f32 %v51, %v84
    %v90 = vadd.f32 %v52, %v87
    %vm91 = vcmask 785408
    %92 = vst.msk [vmem:[#allocation2] sm:$0xff] %vm91, %v89
    %93 = vst.msk [vmem:[#allocation2 + $0x8] sm:$0xff] %vm91, %v90
    // Predicated region
    $region22: #{tpu_custom_call.1} parent=1 // pred_check
      %p94 = pneg %p44
    $region23: #{tpu_custom_call.1} parent=1 // pred_check_branch
      %96 = sbr.rel (%p94) target = $region25
    $region24: #{tpu_custom_call.1} parent=1 // pred_region
      %v97 = vld [vmem:[#allocation2] sm:$0xff]
      %v98 = vld [vmem:[#allocation2 + $0x8] sm:$0xff]
      %99 = vst.msk [vmem:[#allocation8] sm:$0xff] %vm91, %v97
      %100 = vst.msk [vmem:[#allocation8 + $0x8] sm:$0xff] %vm91, %v98
    $region25: #{tpu_custom_call.1} parent=1 // pred_fallthru
      _
    // Predicated region
    $region26: #{tpu_custom_call.1} parent=1 // pred_check
      _
    $region27: #{tpu_custom_call.1} parent=1 // pred_check_branch
      %102 = sbr.rel (0) target = $region29
    $region28: #{tpu_custom_call.1} parent=1 // pred_region
      %104 = vsyncadd [#allocation5], 0
      %s105 = sshll.u32 [#allocation8], 4
      %s106 = int_to_ptr.vmem [resolvable:$true] %s105
      %s107 = sshll.u32 %s2, 4
      %s108 = int_to_ptr.hbm [resolvable:$true] %s107
      %113 = dma.vmem_to_hbm [thread:$0]  %s106, 256, %s108, [#allocation5], 128, 128, 8
    $region29: #{tpu_custom_call.1} parent=1 // pred_fallthru
      _
    // Predicated region
    $region30: #{tpu_custom_call.1} parent=1 // pred_check
      _
    $region31: #{tpu_custom_call.1} parent=1 // pred_check_branch
      %115 = sbr.rel (0) target = $region33
    $region32: #{tpu_custom_call.1} parent=1 // pred_region
      %117 = dma.done [#allocation5], 256
    $region33: #{tpu_custom_call.1} parent=1 // pred_fallthru
      _
    %118 = vsyncpa [#allocation4], 1
    %119 = vsyncpa [#allocation7], 1
    %120 = vsyncpa [#allocation5], 1

</llo_original>
